<compile_context>
chip_gen: v6e
topology: v6e:2x2x1
jax: 0.10.0
libtpu: 0.0.40
codegen_flags: <defaults>
</compile_context>

<pallas_src>
import jax
import jax.numpy as jnp
from jax.experimental import pallas as pl
from jax.experimental.pallas import tpu as pltpu


# ----------------------------------------------------------------------------
# Primary path: direct HBM -> HBM DMA (no VMEM staging).
# ----------------------------------------------------------------------------
def _dma_identity_kernel(x_hbm_ref, o_hbm_ref, sem):
    copy = pltpu.make_async_copy(x_hbm_ref, o_hbm_ref, sem)
    copy.start()
    copy.wait()


def _identity_dma(x):
    return pl.pallas_call(
        _dma_identity_kernel,
        out_shape=jax.ShapeDtypeStruct(x.shape, x.dtype),
        in_specs=[pl.BlockSpec(memory_space=pl.ANY)],
        out_specs=pl.BlockSpec(memory_space=pl.ANY),
        scratch_shapes=[pltpu.SemaphoreType.DMA(())],
    )(x)


# ----------------------------------------------------------------------------
# Fallback path: VMEM-staged tiled copy with lane-dense blocks.
# ----------------------------------------------------------------------------
_TILE_BYTES = 2 * 1024 * 1024  # per-tile cap; in+out double-buffered <= 8 MiB VMEM


def _copy_kernel(x_ref, o_ref):
    o_ref[...] = x_ref[...]


def _identity_tiled(x):
    orig_shape = x.shape
    dtype = x.dtype
    itemsize = jnp.dtype(dtype).itemsize
    # Native sublane packing: 8 rows for 32-bit, 16 for bf16, 32 for int8.
    sublane = max(8, 32 // max(1, itemsize))

    x2d = x.reshape(-1, x.shape[-1]) if x.ndim >= 2 else x.reshape(1, -1)
    R, C = x2d.shape

    aligned = (C % 128 == 0) and (R % sublane == 0)
    small = R * C * itemsize <= _TILE_BYTES

    if not aligned and small:
        # Full-array block is always a legal block shape: single grid step,
        # zero padding, zero extra HBM passes.
        out2d = pl.pallas_call(
            _copy_kernel,
            out_shape=jax.ShapeDtypeStruct((R, C), dtype),
            grid=(1,),
            in_specs=[pl.BlockSpec((R, C), lambda i: (0, 0))],
            out_specs=pl.BlockSpec((R, C), lambda i: (0, 0)),
        )(x2d)
        return out2d.reshape(orig_shape)

    if not aligned:
        # Rare path: large but unaligned. Flatten into a wide lane-dense slab,
        # pad only the tail, then reuse the aligned tiling below.
        n = x.size
        cols = 1024
        rows = pl.cdiv(n, cols)
        prows = pl.cdiv(rows, sublane) * sublane
        flat = jnp.pad(x.reshape(-1), (0, prows * cols - n))
        y = _identity_tiled(flat.reshape(prows, cols))
        return y.reshape(-1)[:n].reshape(orig_shape)

    # Aligned: big lane-dense tiles (full row width whenever it fits the cap).
    max_elems = _TILE_BYTES // itemsize
    if C * sublane <= max_elems:
        tile_c = C
        tile_r = max(sublane, min(R, (max_elems // C) // sublane * sublane))
    else:
        tile_r = sublane
        tile_c = max(128, min(C, (max_elems // sublane) // 128 * 128))

    grid = (pl.cdiv(R, tile_r), pl.cdiv(C, tile_c))
    out2d = pl.pallas_call(
        _copy_kernel,
        out_shape=jax.ShapeDtypeStruct((R, C), dtype),
        grid=grid,
        in_specs=[pl.BlockSpec((tile_r, tile_c), lambda i, j: (i, j))],
        out_specs=pl.BlockSpec((tile_r, tile_c), lambda i, j: (i, j)),
        compiler_params=pltpu.CompilerParams(
            dimension_semantics=("parallel", "parallel")
        ),
    )(x2d)
    return out2d.reshape(orig_shape)


def my_mlp_forward(x):
    """Pallas implementation of MyMLP.forward (identity)."""
    if x.size == 0:
        return x
    try:
        return _identity_dma(x)
    except Exception:  # pragma: no cover — fall back if direct HBM DMA is unavailable
        return _identity_tiled(x)


if __name__ == "__main__":
    key = jax.random.PRNGKey(0)
    # MyMLP has no parameters; forward is identity on an arbitrary tensor.
    x = jax.random.normal(key, (2, 4, 16, 16), dtype=jnp.float32)

    y = my_mlp_forward(x)
    jax.block_until_ready(y)
    assert y.shape == x.shape and y.dtype == x.dtype
    assert bool(jnp.all(y == x))

    # Also exercise the aligned VMEM fallback path on a lane-dense slab.
    x2 = jax.random.normal(jax.random.PRNGKey(0), (256, 1024), dtype=jnp.float32)
    y2 = _identity_tiled(x2)
    jax.block_until_ready(y2)
    assert bool(jnp.all(y2 == x2))

    print("KERNEL_OK")
</pallas_src>

<mosaic_0001>
module attributes {stable_mosaic.version = 11 : i64} {
  func.func @_dma_identity_kernel(%arg0: memref<2x4x16x16xf32, #tpu.memory_space<any>>, %arg1: memref<2x4x16x16xf32, #tpu.memory_space<any>>, %arg2: memref<!tpu.dma_semaphore, #tpu.memory_space<semaphore_mem>>) attributes {dimension_semantics = [], scalar_prefetch = 0 : i64, scratch_operands = 1 : i64, tpu.core_type = #tpu.core_type<tc>} {
    tpu.enqueue_dma source(%arg0 : memref<2x4x16x16xf32, #tpu.memory_space<any>>) target(%arg1 : memref<2x4x16x16xf32, #tpu.memory_space<any>>) target_semaphore(%arg2 : memref<!tpu.dma_semaphore, #tpu.memory_space<semaphore_mem>>)
    tpu.wait_dma2 semaphore(%arg2 : memref<!tpu.dma_semaphore, #tpu.memory_space<semaphore_mem>>) src(%arg0 : memref<2x4x16x16xf32, #tpu.memory_space<any>>) dst(%arg1 : memref<2x4x16x16xf32, #tpu.memory_space<any>>)
    return
  }
}

module attributes {stable_mosaic.version = 11 : i64} {
  func.func @_copy_kernel(%arg0: i32, %arg1: memref<128x16xf32, #tpu.memory_space<vmem>>, %arg2: memref<128x16xf32, #tpu.memory_space<vmem>>) attributes {dimension_semantics = [#tpu.dimension_semantics<arbitrary>], iteration_bounds = array<i64: 1>, scalar_prefetch = 0 : i64, scratch_operands = 0 : i64, tpu.core_type = #tpu.core_type<tc>, window_params = [{pipeline_mode = #tpu.pipeline_mode<synchronous>, transform_indices = @transform_0, window_bounds = array<i64: 128, 16>}, {pipeline_mode = #tpu.pipeline_mode<synchronous>, transform_indices = @transform_1, window_bounds = array<i64: 128, 16>}]} {
    %c0 = arith.constant 0 : index
    %c0_0 = arith.constant 0 : index
    %0 = vector.load %arg1[%c0, %c0_0] : memref<128x16xf32, #tpu.memory_space<vmem>>, vector<128x16xf32>
    %c0_1 = arith.constant 0 : index
    %c0_2 = arith.constant 0 : index
    %1 = vector.load %arg2[%c0_1, %c0_2] : memref<128x16xf32, #tpu.memory_space<vmem>>, vector<128x16xf32>
    tpu.vector_store %arg2[%c0_1, %c0_2], %0 {strides = array<i32>} : memref<128x16xf32, #tpu.memory_space<vmem>>, vector<128x16xf32>,
    return
  }
  func.func @transform_0(%arg0: i32) -> (i32, i32) {
    %c0_i32 = arith.constant 0 : i32
    %c0_i32_0 = arith.constant 0 : i32
    %c0_i32_1 = arith.constant 0 : i32
    return %c0_i32, %c0_i32_0 : i32, i32
  }
  func.func @transform_1(%arg0: i32) -> (i32, i32) {
    %c0_i32 = arith.constant 0 : i32
    %c0_i32_0 = arith.constant 0 : i32
    %c0_i32_1 = arith.constant 0 : i32
    return %c0_i32, %c0_i32_0 : i32, i32
  }
}

</mosaic_0001>

<llo_original>
// kernel: tpu_custom_call.1
$region0: #{tpu_custom_call.1}
  #allocation0 [shape = 'u32[]', space=smem, size = 0x4, offset = 0x4, fixed_abs, tag = 'smem constant byte address 0x4 - core index']
  #allocation1 [shape = 'u32[144,128]{1,0:T(1,128)}', space=vmem, size = 0x12000, scoped, tag = 'internal scratch']
  #allocation2 [shape = 's32[1]{0}', space=sflag, size = 0x4, scoped, tag = 'scratch operand']
  #allocation3 [shape = 's32[]', space=sflag, size = 0x4, offset = 0, fixed_abs, tag = 'sflag constant byte address 0x0 - dummy sync flag']
  #allocation4 [shape = 'u32[0]{0}', space=smem, size = 0, offset = 0, fixed_abs, tag = 'smem constant byte address 0x0 - null']
  %s0 = inlined_call_operand.hbm [shape: f32[2,4,16,16], index: 0, kind: input, shape index: {}]
  %s1 = inlined_call_operand.hbm [shape: f32[2,4,16,16], index: 1, kind: output, shape index: {}]
  %s2 = sld [smem:[#allocation0]]
  $region2: #{tpu_custom_call.1} parent=0
    _
  %s4 = ssub.s32 1, %s2
  %s5 = scalar_select 0, %s4, %s2
  %s7 = sshll.u32 1, 14
  %s8 = sxor.u32 4294967295, %s7
  %12 = dma.general %s0, 2048, %s1, [#allocation2], 131072, [#allocation4], 0, 0
  %s13 = smul.u32 2, 4
  %s14 = smul.u32 %s13, 16
  %s15 = smul.u32 %s14, 1
  %s16 = sshll.u32 %s15, 4
  %17 = dma.done [#allocation2], %s16
  %18 = vsyncmov [#allocation2]
  %s19 = vpop.sfrf %18
  %p20 = scmp.eq.s32.totalorder %s19, 0
  %p21 = pneg %p20
  %23 = shalt.err (%p21)

// kernel: tpu_custom_call.1
$region0: #{tpu_custom_call.1}
  #allocation0 [shape = 'u32[]', space=smem, size = 0x4, offset = 0x4, fixed_abs, tag = 'smem constant byte address 0x4 - core index']
  #allocation1 [shape = 'u32[144,128]{1,0:T(1,128)}', space=vmem, size = 0x12000, scoped, tag = 'internal scratch']
  %s0 = inlined_call_operand.vmem [shape: f32[128,16], index: 0, kind: input, shape index: {}]
  %s1 = inlined_call_operand.vmem [shape: f32[128,16], index: 1, kind: output, shape index: {}]
  %s2 = sld [smem:[#allocation0]]
  $region14: #{tpu_custom_call.1} parent=0
    _
  %s4 = ssub.s32 1, %s2
  %s5 = scalar_select 0, %s4, %s2
  // Predicated region
  $region2: #{tpu_custom_call.1} parent=0 // pred_check
    _
  $region3: #{tpu_custom_call.1} parent=0 // pred_check_branch
    %7 = sbr.rel (0) target = $region5
  $region4: #{tpu_custom_call.1} parent=0 // pred_region
    _
  $region5: #{tpu_custom_call.1} parent=0 // pred_fallthru
    _
  %v8 = vld [vmem:[%s0] sm:$0xff]
  %v9 = vld [vmem:[%s0 + $0x8] sm:$0xff]
  %v10 = vld [vmem:[%s0 + $0x10] sm:$0xff]
  %v11 = vld [vmem:[%s0 + $0x18] sm:$0xff]
  %v12 = vld [vmem:[%s0 + $0x20] sm:$0xff]
  %v13 = vld [vmem:[%s0 + $0x28] sm:$0xff]
  %v14 = vld [vmem:[%s0 + $0x30] sm:$0xff]
  %v15 = vld [vmem:[%s0 + $0x38] sm:$0xff]
  %v16 = vld [vmem:[%s0 + $0x40] sm:$0xff]
  %v17 = vld [vmem:[%s0 + $0x48] sm:$0xff]
  %v18 = vld [vmem:[%s0 + $0x50] sm:$0xff]
  %v19 = vld [vmem:[%s0 + $0x58] sm:$0xff]
  %v20 = vld [vmem:[%s0 + $0x60] sm:$0xff]
  %v21 = vld [vmem:[%s0 + $0x68] sm:$0xff]
  %v22 = vld [vmem:[%s0 + $0x70] sm:$0xff]
  %v23 = vld [vmem:[%s0 + $0x78] sm:$0xff]
  %vm24 = vcmask 130048
  %25 = vst.msk [vmem:[%s1] sm:$0xff] %vm24, %v8
  %26 = vst.msk [vmem:[%s1 + $0x8] sm:$0xff] %vm24, %v9
  %27 = vst.msk [vmem:[%s1 + $0x10] sm:$0xff] %vm24, %v10
  %28 = vst.msk [vmem:[%s1 + $0x18] sm:$0xff] %vm24, %v11
  %29 = vst.msk [vmem:[%s1 + $0x20] sm:$0xff] %vm24, %v12
  %30 = vst.msk [vmem:[%s1 + $0x28] sm:$0xff] %vm24, %v13
  %31 = vst.msk [vmem:[%s1 + $0x30] sm:$0xff] %vm24, %v14
  %32 = vst.msk [vmem:[%s1 + $0x38] sm:$0xff] %vm24, %v15
  %33 = vst.msk [vmem:[%s1 + $0x40] sm:$0xff] %vm24, %v16
  %34 = vst.msk [vmem:[%s1 + $0x48] sm:$0xff] %vm24, %v17
  %35 = vst.msk [vmem:[%s1 + $0x50] sm:$0xff] %vm24, %v18
  %36 = vst.msk [vmem:[%s1 + $0x58] sm:$0xff] %vm24, %v19
  %37 = vst.msk [vmem:[%s1 + $0x60] sm:$0xff] %vm24, %v20
  %38 = vst.msk [vmem:[%s1 + $0x68] sm:$0xff] %vm24, %v21
  %39 = vst.msk [vmem:[%s1 + $0x70] sm:$0xff] %vm24, %v22
  %40 = vst.msk [vmem:[%s1 + $0x78] sm:$0xff] %vm24, %v23
  // Predicated region
  $region6: #{tpu_custom_call.1} parent=0 // pred_check
    _
  $region7: #{tpu_custom_call.1} parent=0 // pred_check_branch
    %42 = sbr.rel (0) target = $region9
  $region8: #{tpu_custom_call.1} parent=0 // pred_region
    _
  $region9: #{tpu_custom_call.1} parent=0 // pred_fallthru
    _
  // Predicated region
  $region10: #{tpu_custom_call.1} parent=0 // pred_check
    _
  $region11: #{tpu_custom_call.1} parent=0 // pred_check_branch
    %44 = sbr.rel (0) target = $region13
  $region12: #{tpu_custom_call.1} parent=0 // pred_region
    _
  $region13: #{tpu_custom_call.1} parent=0 // pred_fallthru
    _

</llo_original>
